<compile_context>
chip_gen: v6e
topology: v6e:2x2x1
jax: 0.10.0
libtpu: 0.0.40
codegen_flags: <defaults>
</compile_context>

<pallas_src>
import math

import jax
import jax.numpy as jnp
from jax.experimental import pallas as pl
from jax.experimental.pallas import tpu as pltpu


def _round_up(v, m):
    return ((int(v) + m - 1) // m) * m


def fourier_feature_kernel(x_ref, bt_ref, o_ref):
    # x_ref : (TN, in_dim)   VMEM tile
    # bt_ref: (in_dim, M)    full (2*pi)*B^T, resident in VMEM (constant index_map)
    # o_ref : (TN, 2*M)
    in_dim, m = bt_ref.shape
    x = x_ref[...].astype(jnp.float32)
    bt = bt_ref[...].astype(jnp.float32)  # already includes the 2*pi factor

    if in_dim <= 16:
        # Small contraction dim: K broadcast FMAs on the VPU (exact f32),
        # hidden under the EUP/HBM bottleneck; avoids MXU push/pop latency
        # on a nearly-empty systolic array.
        proj = x[:, 0:1] * bt[0:1, :]
        for k in range(1, in_dim):
            proj = proj + x[:, k : k + 1] * bt[k : k + 1, :]
    else:
        proj = jnp.dot(x, bt, preferred_element_type=jnp.float32)

    # sin(t + pi/2) == cos(t): build one lane-dense (TN, 2M) phase buffer with
    # cheap VPU/XLU work, then run a single full-width transcendental stream.
    phase = jnp.concatenate([proj, proj + (0.5 * math.pi)], axis=-1)
    # Single lane-dense store of the full (TN, 2M) slab.
    o_ref[...] = jnp.sin(phase).astype(o_ref.dtype)


def fourier_feature_layer(x, B, *, tile_n=None, out_dtype=None,
                          vmem_budget_bytes=24 * 1024 * 1024,
                          target_out_block_bytes=2 * 1024 * 1024):
    """x: (N, in_dim); B: (mapping_size, in_dim).

    Returns (N, 2*mapping_size) = concat([sin(2*pi*x@B.T), cos(2*pi*x@B.T)], -1).
    out_dtype=jnp.bfloat16 halves the (dominant) writeback traffic; recommended
    on v5e/v6e if downstream tolerates bf16.
    """
    n, in_dim = x.shape
    m, in_dim_b = B.shape
    assert in_dim == in_dim_b
    out_dtype = x.dtype if out_dtype is None else jnp.dtype(out_dtype)
    out_bytes = jnp.dtype(out_dtype).itemsize
    in_bytes = x.dtype.itemsize

    # Lane-padded widths actually occupied in VMEM (last dim pads to 128).
    lane_in = _round_up(max(in_dim, 1), 128)
    lane_m = _round_up(m, 128)
    lane_2m = _round_up(2 * m, 128)

    if tile_n is None:
        # Bytes per row of tile, including lane padding and full-tile f32
        # intermediates (proj, phase, pre-cast sin result):
        per_row = (2 * lane_in * in_bytes        # x tile, double-buffered
                   + 2 * lane_2m * out_bytes     # out tile, double-buffered
                   + lane_m * 4                  # proj (f32 intermediate)
                   + lane_2m * 4                 # phase (f32 intermediate)
                   + lane_2m * 4)                # sin result pre-cast (f32)
        fixed = 2 * _round_up(in_dim, 8) * lane_m * 4  # resident (2*pi)*B^T
        max_rows = max(8, (vmem_budget_bytes - fixed) // per_row)

        # Target a ~1-4 MiB output block (pipeline-efficiency plateau) but stay
        # within the VMEM budget.
        target_rows = max(8, target_out_block_bytes // (lane_2m * out_bytes))
        tile_n = int(min(target_rows, max_rows))
        tile_n = max(8, (tile_n // 8) * 8)

        # Ensure >= 2 grid steps when N allows it, so v7x's second TensorCore
        # gets work (grid axis is "parallel"); harmless on single-TC v5e/v6e.
        n8 = _round_up(max(n, 1), 8)
        if n8 >= 16:
            half = _round_up(pl.cdiv(n8, 2), 8)
            tile_n = min(tile_n, half)
    else:
        tile_n = max(8, _round_up(int(tile_n), 8))

    # Don't exceed (padded) n.
    tile_n = min(tile_n, max(8, _round_up(max(n, 1), 8)))

    # Ragged N: pad rows, slice back afterwards (padded rows are cheap zeros).
    n_pad = pl.cdiv(n, tile_n) * tile_n
    x_p = x if n_pad == n else jnp.pad(x, ((0, n_pad - n), (0, 0)))

    # Fold the 2*pi scale into the constant buffer once (plain-JAX glue).
    b_t = (2.0 * math.pi) * jnp.transpose(B).astype(jnp.float32)  # (in_dim, M)

    grid = (n_pad // tile_n,)
    cost = pl.CostEstimate(
        flops=2 * n_pad * m * in_dim,
        transcendentals=2 * n_pad * m,
        bytes_accessed=(n_pad * in_dim * in_bytes
                        + in_dim * m * 4
                        + n_pad * 2 * m * out_bytes),
    )

    # Honor the budget (scoped default: 16 MiB v5e, 32 MiB v6e/v7x), with a
    # small headroom, capped well below v7x's 64 MiB physical VMEM.
    vmem_limit = int(min(56 * 1024 * 1024, vmem_budget_bytes + 8 * 1024 * 1024))

    out = pl.pallas_call(
        fourier_feature_kernel,
        out_shape=jax.ShapeDtypeStruct((n_pad, 2 * m), out_dtype),
        grid_spec=pltpu.PrefetchScalarGridSpec(
            num_scalar_prefetch=0,
            grid=grid,
            in_specs=[
                pl.BlockSpec((tile_n, in_dim), lambda i: (i, 0)),
                # Constant index_map: (2*pi)*B^T stays resident across the grid.
                pl.BlockSpec((in_dim, m), lambda i: (0, 0)),
            ],
            out_specs=pl.BlockSpec((tile_n, 2 * m), lambda i: (i, 0)),
        ),
        compiler_params=pltpu.CompilerParams(
            dimension_semantics=("parallel",),
            vmem_limit_bytes=vmem_limit,
        ),
        cost_estimate=cost,
    )(x_p, b_t)

    return out[:n] if n_pad != n else out


if __name__ == "__main__":
    # Module config (small): in_dim=4, mapping_size=64 (2*M = 128 -> lane-dense
    # output), scale=10.0, batch of 40 input points (ragged vs tile_n=16).
    in_dim = 4
    mapping_size = 64
    scale = 10.0
    n_points = 40

    key = jax.random.PRNGKey(0)
    kx, kb = jax.random.split(key)

    x = jax.random.normal(kx, (n_points, in_dim), dtype=jnp.float32)
    # Deterministic synthetic init of the registered buffer B ~ N(0,1) * scale.
    B = jax.random.normal(kb, (mapping_size, in_dim), dtype=jnp.float32) * scale

    # Plain-JAX reference (high-precision projection).
    proj_ref = 2.0 * math.pi * jnp.einsum(
        "ni,mi->nm", x, B, precision=jax.lax.Precision.HIGHEST)
    ref = jnp.concatenate([jnp.sin(proj_ref), jnp.cos(proj_ref)], axis=-1)

    # 1) explicit small tile -> exercises ragged-N padding + multi-step grid.
    out_tiled = jax.block_until_ready(fourier_feature_layer(x, B, tile_n=16))
    assert out_tiled.shape == (n_points, 2 * mapping_size)
    assert jnp.allclose(out_tiled, ref, atol=1e-3, rtol=1e-3)

    # 2) default auto tiling (output-block-sized tile_n, >=2 grid steps).
    out_auto = jax.block_until_ready(fourier_feature_layer(x, B))
    assert out_auto.shape == (n_points, 2 * mapping_size)
    assert jnp.allclose(out_auto, ref, atol=1e-3, rtol=1e-3)

    # 3) bf16 output (halves writeback traffic); compute stays f32 in-kernel.
    out_bf16 = jax.block_until_ready(
        fourier_feature_layer(x, B, out_dtype=jnp.bfloat16))
    assert out_bf16.dtype == jnp.bfloat16
    assert jnp.allclose(out_bf16.astype(jnp.float32), ref, atol=2e-2, rtol=2e-2)

    print("KERNEL_OK")
</pallas_src>

<mosaic_0001>
module attributes {stable_mosaic.version = 11 : i64} {
  func.func @fourier_feature_kernel(%arg0: i32, %arg1: memref<16x4xf32, #tpu.memory_space<vmem>>, %arg2: memref<4x64xf32, #tpu.memory_space<vmem>>, %arg3: memref<16x128xf32, #tpu.memory_space<vmem>>) attributes {dimension_semantics = [#tpu.dimension_semantics<parallel>], iteration_bounds = array<i64: 3>, scalar_prefetch = 0 : i64, scratch_operands = 0 : i64, tpu.core_type = #tpu.core_type<tc>, window_params = [{transform_indices = @transform_0, window_bounds = array<i64: 16, 4>}, {pipeline_mode = #tpu.pipeline_mode<synchronous>, transform_indices = @transform_1, window_bounds = array<i64: 4, 64>}, {transform_indices = @transform_2, window_bounds = array<i64: 16, 128>}]} {
    %c0 = arith.constant 0 : index
    %c0_0 = arith.constant 0 : index
    %0 = vector.load %arg1[%c0, %c0_0] : memref<16x4xf32, #tpu.memory_space<vmem>>, vector<16x4xf32>
    %c0_1 = arith.constant 0 : index
    %c0_2 = arith.constant 0 : index
    %1 = vector.load %arg2[%c0_1, %c0_2] : memref<4x64xf32, #tpu.memory_space<vmem>>, vector<4x64xf32>
    %2 = vector.extract_strided_slice %0 {offsets = [0, 0], sizes = [16, 1], strides = [1, 1]} : vector<16x4xf32> to vector<16x1xf32>
    %3 = vector.extract_strided_slice %1 {offsets = [0, 0], sizes = [1, 64], strides = [1, 1]} : vector<4x64xf32> to vector<1x64xf32>
    %4 = vector.broadcast %2 : vector<16x1xf32> to vector<16x64xf32>
    %5 = vector.broadcast %3 : vector<1x64xf32> to vector<16x64xf32>
    %6 = arith.mulf %4, %5 : vector<16x64xf32>
    %7 = vector.extract_strided_slice %0 {offsets = [0, 1], sizes = [16, 1], strides = [1, 1]} : vector<16x4xf32> to vector<16x1xf32>
    %8 = vector.extract_strided_slice %1 {offsets = [1, 0], sizes = [1, 64], strides = [1, 1]} : vector<4x64xf32> to vector<1x64xf32>
    %9 = vector.broadcast %7 : vector<16x1xf32> to vector<16x64xf32>
    %10 = vector.broadcast %8 : vector<1x64xf32> to vector<16x64xf32>
    %11 = arith.mulf %9, %10 : vector<16x64xf32>
    %12 = arith.addf %6, %11 : vector<16x64xf32>
    %13 = vector.extract_strided_slice %0 {offsets = [0, 2], sizes = [16, 1], strides = [1, 1]} : vector<16x4xf32> to vector<16x1xf32>
    %14 = vector.extract_strided_slice %1 {offsets = [2, 0], sizes = [1, 64], strides = [1, 1]} : vector<4x64xf32> to vector<1x64xf32>
    %15 = vector.broadcast %13 : vector<16x1xf32> to vector<16x64xf32>
    %16 = vector.broadcast %14 : vector<1x64xf32> to vector<16x64xf32>
    %17 = arith.mulf %15, %16 : vector<16x64xf32>
    %18 = arith.addf %12, %17 : vector<16x64xf32>
    %19 = vector.extract_strided_slice %0 {offsets = [0, 3], sizes = [16, 1], strides = [1, 1]} : vector<16x4xf32> to vector<16x1xf32>
    %20 = vector.extract_strided_slice %1 {offsets = [3, 0], sizes = [1, 64], strides = [1, 1]} : vector<4x64xf32> to vector<1x64xf32>
    %21 = vector.broadcast %19 : vector<16x1xf32> to vector<16x64xf32>
    %22 = vector.broadcast %20 : vector<1x64xf32> to vector<16x64xf32>
    %23 = arith.mulf %21, %22 : vector<16x64xf32>
    %24 = arith.addf %18, %23 : vector<16x64xf32>
    %cst = arith.constant 1.57079637 : f32
    %25 = vector.broadcast %cst : f32 to vector<16x64xf32>
    %26 = arith.addf %24, %25 : vector<16x64xf32>
    %27 = tpu.concatenate %24, %26 in 1 : vector<16x64xf32>, vector<16x64xf32> -> vector<16x128xf32>
    %28 = math.sin %27 : vector<16x128xf32>
    %c0_3 = arith.constant 0 : index
    %c0_4 = arith.constant 0 : index
    %29 = vector.load %arg3[%c0_3, %c0_4] : memref<16x128xf32, #tpu.memory_space<vmem>>, vector<16x128xf32>
    tpu.vector_store %arg3[%c0_3, %c0_4], %28 {strides = array<i32>} : memref<16x128xf32, #tpu.memory_space<vmem>>, vector<16x128xf32>,
    return
  }
  func.func @transform_0(%arg0: i32) -> (i32, i32) {
    %c0_i32 = arith.constant 0 : i32
    %c0_i32_0 = arith.constant 0 : i32
    return %arg0, %c0_i32 : i32, i32
  }
  func.func @transform_1(%arg0: i32) -> (i32, i32) {
    %c0_i32 = arith.constant 0 : i32
    %c0_i32_0 = arith.constant 0 : i32
    %c0_i32_1 = arith.constant 0 : i32
    return %c0_i32, %c0_i32_0 : i32, i32
  }
  func.func @transform_2(%arg0: i32) -> (i32, i32) {
    %c0_i32 = arith.constant 0 : i32
    %c0_i32_0 = arith.constant 0 : i32
    return %arg0, %c0_i32 : i32, i32
  }
}

</mosaic_0001>

<llo_original>
// kernel: tpu_custom_call.1
$region0: #{tpu_custom_call.1}
  #allocation0 [shape = 'u32[]', space=smem, size = 0x4, offset = 0x4, fixed_abs, tag = 'smem constant byte address 0x4 - core index']
  #allocation1 [shape = 'u32[144,128]{1,0:T(1,128)}', space=vmem, size = 0x12000, scoped, tag = 'internal scratch']
  %s0 = inlined_call_operand.vmem [shape: f32[48,4], index: 0, kind: input, shape index: {}]
  %s1 = inlined_call_operand.vmem [shape: f32[4,64], index: 1, kind: input, shape index: {}]
  %s2 = inlined_call_operand.hbm [shape: f32[48,128], index: 2, kind: output, shape index: {}]
  %s3 = sld [smem:[#allocation0]]
  $region41: #{tpu_custom_call.1} parent=0
    _
  %s5 = ssub.s32 1, %s3
  %s6 = scalar_select 0, %s5, %s3
  $region1: #{tpu_custom_call.1} parent=0
    #allocation2 [shape = 'u8[16384]{0}', space=vmem, size = 0x4000, scoped, tag = 'output window, operand 0']
    #allocation3 [shape = 's32[2]{0}', space=sflag, size = 0x8, scoped, tag = 'scoped memory for tpu_custom_call.1']
    %7 = vsyncpa [#allocation3], 0
    %s8 = scalar_lea.sflag [#allocation3], 1
    %9 = vsyncpa %s8, 0
    loop: start=0, step=1, limit=5
    $region2: #{tpu_custom_call.1} parent=1 // loop_pre_header
      _
    $region3: #{tpu_custom_call.1} parent=1 // loop_header
      %s11 = sphi 0, %s15
      %p12 = scmp.ge.s32.totalorder %s11, 5
      %s21 = sphi 0, %s23
      %s24 = sphi 0, %s21
      %s25 = sphi 0, %s24
      %s41 = sphi 0, %s25
      %s45 = sphi 0, %s45
      %s47 = sphi 0, %s45
      %s48 = sphi 0, %s47
      %s62 = sphi 0, %s48
      %s68 = sphi 0, %s70
      %s71 = sphi 0, %s68
      %s72 = sphi 0, %s71
      %s88 = sphi 0, %s72
    $region4: #{tpu_custom_call.1} parent=1 // loop_header_branch
      %14 = sbr.rel (%p12) target = $region8
    $region5: #{tpu_custom_call.1} parent=1 // loop_body
      %s16 = ssub.s32 %s11, 1
      %s17 = ssub.s32 %s11, 2
      %s18 = sadd.s32 %s11, 1
      %s19 = ssub.s32 %s11, %s18
      %p20 = scmp.eq.s32.totalorder %s19, 0
      %s22 = sadd.s32 %s21, 1
      %s23 = scalar_select %p20, %s21, %s22
      %p26 = pneg %p20
      %p27 = scmp.eq.s32.totalorder %s11, 2
      %p28 = por %p26, %p27
      %p29 = scmp.ne.s32.totalorder %s21, %s24
      %p30 = scmp.eq.s32.totalorder %s11, 0
      %p31 = por %p29, %p30
      %p32 = scmp.ne.s32.totalorder %s21, %s24
      %p33 = scmp.eq.s32.totalorder %s16, 2
      %p34 = por %p32, %p33
      %p35 = scmp.ne.s32.totalorder %s24, %s25
      %p36 = scmp.eq.s32.totalorder %s16, 0
      %p37 = por %p35, %p36
      %p38 = scmp.ne.s32.totalorder %s24, %s25
      %p39 = scmp.eq.s32.totalorder %s17, 2
      %p40 = por %p38, %p39
      %p42 = scmp.ne.s32.totalorder %s25, %s41
      %p43 = scmp.eq.s32.totalorder %s17, 0
      %p44 = por %p42, %p43
      %s46 = sadd.s32 %s45, 1
      %p49 = scmp.eq.s32.totalorder %s11, 2
      %p50 = scmp.ne.s32.totalorder %s45, %s47
      %p51 = scmp.eq.s32.totalorder %s11, 0
      %p52 = por %p50, %p51
      %p53 = scmp.ne.s32.totalorder %s45, %s47
      %p54 = scmp.eq.s32.totalorder %s16, 2
      %p55 = por %p53, %p54
      %p56 = scmp.ne.s32.totalorder %s47, %s48
      %p57 = scmp.eq.s32.totalorder %s16, 0
      %p58 = por %p56, %p57
      %p59 = scmp.ne.s32.totalorder %s47, %s48
      %p60 = scmp.eq.s32.totalorder %s17, 2
      %p61 = por %p59, %p60
      %p63 = scmp.ne.s32.totalorder %s48, %s62
      %p64 = scmp.eq.s32.totalorder %s17, 0
      %p65 = por %p63, %p64
      %s66 = ssub.s32 %s11, %s18
      %p67 = scmp.eq.s32.totalorder %s66, 0
      %s69 = sadd.s32 %s68, 1
      %s70 = scalar_select %p67, %s68, %s69
      %p73 = pneg %p67
      %p74 = scmp.eq.s32.totalorder %s11, 2
      %p75 = por %p73, %p74
      %p76 = scmp.ne.s32.totalorder %s68, %s71
      %p77 = scmp.eq.s32.totalorder %s11, 0
      %p78 = por %p76, %p77
      %p79 = scmp.ne.s32.totalorder %s68, %s71
      %p80 = scmp.eq.s32.totalorder %s16, 2
      %p81 = por %p79, %p80
      %p82 = scmp.ne.s32.totalorder %s71, %s72
      %p83 = scmp.eq.s32.totalorder %s16, 0
      %p84 = por %p82, %p83
      %p85 = scmp.ne.s32.totalorder %s71, %s72
      %p86 = scmp.eq.s32.totalorder %s17, 2
      %p87 = por %p85, %p86
      %p89 = scmp.ne.s32.totalorder %s72, %s88
      %p90 = scmp.eq.s32.totalorder %s17, 0
      %p91 = por %p89, %p90
      %p92 = scmp.le.s32.totalorder 1, %s11
      %p93 = scmp.lt.s32.totalorder %s11, 4
      %p94 = pnand %p92, %p93
      %p95 = pneg %p94
      // Predicated region
      $region9: #{tpu_custom_call.1} parent=5 // pred_check
        _
      $region10: #{tpu_custom_call.1} parent=5 // pred_check_branch
        %97 = sbr.rel (%p94) target = $region12
      $region11: #{tpu_custom_call.1} parent=5 // pred_region
        %s98 = ssub.s32 %s11, 1
        // Predicated region
        $region13: #{tpu_custom_call.1} parent=11 // pred_check
          %p99 = pneg %p58
        $region14: #{tpu_custom_call.1} parent=11 // pred_check_branch
          %101 = sbr.rel (%p99) target = $region16
        $region15: #{tpu_custom_call.1} parent=11 // pred_region
          _
        $region16: #{tpu_custom_call.1} parent=11 // pred_fallthru
          _
      $region12: #{tpu_custom_call.1} parent=5 // pred_fallthru
        _
      %p102 = scmp.lt.s32.totalorder %s11, 3
      // Predicated region
      $region17: #{tpu_custom_call.1} parent=5 // pred_check
        %p103 = pneg %p102
      $region18: #{tpu_custom_call.1} parent=5 // pred_check_branch
        %105 = sbr.rel (%p103) target = $region20
      $region19: #{tpu_custom_call.1} parent=5 // pred_region
        // Predicated region
        $region21: #{tpu_custom_call.1} parent=19 // pred_check
          %p106 = pneg %p31
        $region22: #{tpu_custom_call.1} parent=19 // pred_check_branch
          %108 = sbr.rel (%p106) target = $region24
        $region23: #{tpu_custom_call.1} parent=19 // pred_region
          %s109 = smul.u32 2, %s11
          %p110 = scmp.lt.s32.totalorder %s109, 5
          %s111 = scalar_select %p110, %s109, 5
          %s112 = smul.addr %s111, 8
          %s113 = scalar_lea.vmem %s0, %s112
          %s114 = smul.u32 2, %s11
        $region24: #{tpu_custom_call.1} parent=19 // pred_fallthru
          _
      $region20: #{tpu_custom_call.1} parent=5 // pred_fallthru
        _
      %p115 = scmp.le.s32.totalorder 1, %s11
      %p116 = scmp.lt.s32.totalorder %s11, 4
      %p117 = pnand %p115, %p116
      %p118 = pneg %p117
      // Predicated region
      $region25: #{tpu_custom_call.1} parent=5 // pred_check
        _
      $region26: #{tpu_custom_call.1} parent=5 // pred_check_branch
        %120 = sbr.rel (%p117) target = $region28
      $region27: #{tpu_custom_call.1} parent=5 // pred_region
        %s121 = ssub.s32 %s11, 1
        %s122 = smul.u32 2, %s16
        %p123 = scmp.lt.s32.totalorder %s122, 5
        %s124 = scalar_select %p123, %s122, 5
        %s125 = smul.addr %s124, 8
        %s126 = scalar_lea.vmem %s0, %s125
        %p127 = pneg %p37
        %p128 = pneg %p34
        %p129 = pneg %p58
        %p130 = pneg %p55
        %p131 = pneg %p84
        %p132 = pneg %p81
        %s133 = sand.u32 %s71, 1
        %s134 = scalar_lea.sflag [#allocation3], %s133
        %s135 = sand.u32 %s71, 1
        %s136 = smul.addr %s135, 16
        %s137 = scalar_lea.vmem [#allocation2], %s136
        %s138 = smul.u32 2, %s16
        %p139 = scmp.lt.s32.totalorder %s138, 5
        %s140 = scalar_select %p139, %s138, 5
        %s141 = smul.addr %s140, 8
        %s142 = scalar_lea.vmem %s0, %s141
        %s143 = smul.u32 2, %s16
        %s144 = smul.u32 2, %s16
        %v145 = vld [vmem:[%s142] sm:$0xff]
        %v146 = vld [vmem:[%s142 + $0x8] sm:$0xff]
        %v147 = vld [vmem:[%s1] sm:$0xf]
        %149 = vset.pattern.permute.xlu0 0
        %150 = vperm.xlu0 %149, %v145
        %v151 = vpop.permute.xlu0 %150
        %154 = vset.pattern.permute.xlu0 0
        %155 = vperm.xlu0 %154, %v146
        %v156 = vpop.permute.xlu0 %155
        %v158 = vlaneseq
        %v159 = vshrl.u32 %v158, 7
        %v160 = vsub.s32 0, %v159
        %v161 = vrot.slane %v147, %v160
        %v162 = vmul.f32 %v151, %v161
        %v163 = vmul.f32 %v156, %v161
        %164 = vset.pattern.permute.xlu0 1
        %165 = vperm.xlu0 %164, %v145
        %v166 = vpop.permute.xlu0 %165
        %168 = vset.pattern.permute.xlu0 1
        %169 = vperm.xlu0 %168, %v146
        %v170 = vpop.permute.xlu0 %169
        %v172 = vlaneseq
        %v173 = vshrl.u32 %v172, 7
        %v174 = vsub.s32 1, %v173
        %v175 = vrot.slane %v147, %v174
        %v176 = vmul.f32 %v166, %v175
        %v177 = vmul.f32 %v170, %v175
        %v178 = vadd.f32 %v162, %v176
        %v179 = vadd.f32 %v163, %v177
        %180 = vset.pattern.permute.xlu0 2
        %181 = vperm.xlu0 %180, %v145
        %v182 = vpop.permute.xlu0 %181
        %184 = vset.pattern.permute.xlu0 2
        %185 = vperm.xlu0 %184, %v146
        %v186 = vpop.permute.xlu0 %185
        %v188 = vlaneseq
        %v189 = vshrl.u32 %v188, 7
        %v190 = vsub.s32 2, %v189
        %v191 = vrot.slane %v147, %v190
        %v192 = vmul.f32 %v182, %v191
        %v193 = vmul.f32 %v186, %v191
        %v194 = vadd.f32 %v178, %v192
        %v195 = vadd.f32 %v179, %v193
        %196 = vset.pattern.permute.xlu0 3
        %197 = vperm.xlu0 %196, %v145
        %v198 = vpop.permute.xlu0 %197
        %200 = vset.pattern.permute.xlu0 3
        %201 = vperm.xlu0 %200, %v146
        %v202 = vpop.permute.xlu0 %201
        %v204 = vlaneseq
        %v205 = vshrl.u32 %v204, 7
        %v206 = vsub.s32 3, %v205
        %v207 = vrot.slane %v147, %v206
        %v208 = vmul.f32 %v198, %v207
        %v209 = vmul.f32 %v202, %v207
        %v210 = vadd.f32 %v194, %v208
        %v211 = vadd.f32 %v195, %v209
        %v212 = vadd.f32 %v210, 1.5707964
        %v213 = vadd.f32 %v211, 1.5707964
        %216 = vrot.lane.b32.xlu0 %v212, 64
        %v217 = vpop.permute.xlu0 %216
        %218 = vrot.lane.b32.xlu0 %v213, 64
        %v219 = vpop.permute.xlu0 %218
        %vm222 = vcmask 523264
        %v223 = vsel %vm222, %v210, %v217
        %v224 = vsel %vm222, %v211, %v219
        %v225 = vand.u32 2147483647, %v223
        %vm226 = vcmp.le.f32.partialorder %v225, 0.7853982
        %vm227 = vcmp.lt.s32.totalorder %v223, 0
        %v228 = vand.u32 %v223, 2139095040
        %v229 = vshrl.u32 %v228, 23
        %v230 = vsub.s32 %v229, 127
        %v231 = vand.u32 2147483647, %v223
        %v232 = vand.u32 %v231, 8388607
        %v233 = vor.u32 %v232, 8388608
        %v234 = vsub.s32 0, %v233
        %v235 = vadd.s32 %v230, 1
        %vm236 = vcmp.gt.s32.totalorder %v235, 0
        %v237 = vsel %vm236, %v235, 0
        %v238 = vshrl.u32 %v237, 5
        %v239 = vand.u32 %v237, 31
        %v240 = vsub.s32 32, %v239
        %v241 = vshrl.u32 683565275, %v240
        %v242 = vshll.u32 683565275, %v239
        %v243 = vshrl.u32 2475754826, %v240
        %v244 = vor.u32 %v242, %v243
        %v245 = vshll.u32 2475754826, %v239
        %v246 = vshrl.u32 2131351028, %v240
        %v247 = vor.u32 %v245, %v246
        %v248 = vshll.u32 2131351028, %v239
        %v249 = vshrl.u32 2102212464, %v240
        %v250 = vor.u32 %v248, %v249
        %v251 = vshll.u32 2102212464, %v239
        %v252 = vshrl.u32 920167782, %v240
        %v253 = vor.u32 %v251, %v252
        %v254 = vshll.u32 920167782, %v239
        %v255 = vshrl.u32 1326507024, %v240
        %v256 = vor.u32 %v254, %v255
        %vm257 = vcmp.lt.s32.totalorder %v238, 1
        %vm258 = vcmp.lt.s32.totalorder %v238, 2
        %vm259 = vcmp.lt.s32.totalorder %v238, 3
        %vm260 = vcmp.lt.s32.totalorder %v238, 4
        %v261 = vsel %vm257, %v241, %v244
        %v262 = vsel %vm260, %v250, 2102212464
        %v263 = vsel %vm259, %v247, %v262
        %v264 = vsel %vm258, %v261, %v263
        %v265 = vsel %vm257, %v244, %v247
        %v266 = vsel %vm260, %v253, 920167782
        %v267 = vsel %vm259, %v250, %v266
        %v268 = vsel %vm258, %v265, %v267
        %v269 = vsel %vm257, %v247, %v250
        %v270 = vsel %vm260, %v256, 1326507024
        %v271 = vsel %vm259, %v253, %v270
        %v272 = vsel %vm258, %v269, %v271
        %v273 = vshll.u32 %v233, 8
        %v274 = vmul.u32.u64.compose %v273, %v272
        %v275 = vextract.low.u32 %v274
        %v276 = vextract.high.u32 %v274
        %v277 = vmul.u32.u64.compose %v273, %v268
        %v278 = vextract.low.u32 %v277
        %v279 = vextract.high.u32 %v277
        %v280 = vmul.u32 %v273, %v264
        %v281 = vadd.s32 %v276, %v278
        %vm282 = vc.u32 %v276, %v278
        %v283 = vadd.s32 %v279, 1
        %v284 = vsel %vm282, %v283, %v279
        %v285 = vadd.s32 %v280, %v284
        %v286 = vadd.s32 %v285, 536870912
        %v287 = vshrl.u32 %v286, 30
        %v288 = vshll.u32 %v287, 30
        %v289 = vsub.s32 %v285, %v288
        %vm290 = vcmp.lt.s32.totalorder %v289, 0
        %v291 = vsub.s32 0, %v289
        %v292 = vsel %vm290, %v291, %v289
        %v293 = vclz %v292
        %v294 = vsub.s32 %v293, 2
        %vm295 = vcmp.gt.s32.totalorder 0, %v294
        %v296 = vsel %vm295, 0, %v294
        %v297 = vsub.s32 32, %v296
        %v298 = vshll.u32 %v289, %v296
        %v299 = vshrl.u32 %v281, %v297
        %v300 = vor.u32 %v298, %v299
        %v301 = vsub.s32 4294967266, %v296
        %v302 = vadd.s32 %v301, 127
        %v303 = vshll.u32 %v302, 23
        %v304 = vor.u32 4788187, %v303
        %v305 = vand.u32 2147483647, %v304
        %v307 = vcvt.s32.f32 %v300
        %v308 = vmul.f32 %v307, %v305
        %v309 = vxor.u32 %v308, 2147483648
        %v310 = vsel %vm227, %v309, %v308
        %v311 = vsub.s32 4, %v287
        %v312 = vsel %vm227, %v311, %v287
        %v313 = vsel %vm226, %v223, %v310
        %v314 = vsel %vm226, 0, %v312
        %v315 = vcosq.f32.pop %v313
        %v316 = vsinq.f32.pop %v313
        %vm317 = vweird.f32 %v223
        %v318 = vadd.s32 %v314, 3
        %v319 = vand.u32 %v318, 3
        %vm320 = vcmp.lt.s32.totalorder %v319, 2
        %vm321 = vcmp.eq.s32.totalorder %v319, 0
        %v322 = vxor.u32 %v316, 2147483648
        %v323 = vsel %vm321, %v315, %v322
        %vm324 = vcmp.eq.s32.totalorder %v319, 2
        %v325 = vxor.u32 %v315, 2147483648
        %v326 = vsel %vm324, %v325, %v316
        %v327 = vsel %vm320, %v323, %v326
        %v328 = vsel %vm317, nan, %v327
        %v329 = vand.u32 2147483647, %v224
        %vm330 = vcmp.le.f32.partialorder %v329, 0.7853982
        %vm331 = vcmp.lt.s32.totalorder %v224, 0
        %v332 = vand.u32 %v224, 2139095040
        %v333 = vshrl.u32 %v332, 23
        %v334 = vsub.s32 %v333, 127
        %v335 = vand.u32 2147483647, %v224
        %v336 = vand.u32 %v335, 8388607
        %v337 = vor.u32 %v336, 8388608
        %v338 = vsub.s32 0, %v337
        %v339 = vadd.s32 %v334, 1
        %vm340 = vcmp.gt.s32.totalorder %v339, 0
        %v341 = vsel %vm340, %v339, 0
        %v342 = vshrl.u32 %v341, 5
        %v343 = vand.u32 %v341, 31
        %v344 = vsub.s32 32, %v343
        %v345 = vshrl.u32 683565275, %v344
        %v346 = vshll.u32 683565275, %v343
        %v347 = vshrl.u32 2475754826, %v344
        %v348 = vor.u32 %v346, %v347
        %v349 = vshll.u32 2475754826, %v343
        %v350 = vshrl.u32 2131351028, %v344
        %v351 = vor.u32 %v349, %v350
        %v352 = vshll.u32 2131351028, %v343
        %v353 = vshrl.u32 2102212464, %v344
        %v354 = vor.u32 %v352, %v353
        %v355 = vshll.u32 2102212464, %v343
        %v356 = vshrl.u32 920167782, %v344
        %v357 = vor.u32 %v355, %v356
        %v358 = vshll.u32 920167782, %v343
        %v359 = vshrl.u32 1326507024, %v344
        %v360 = vor.u32 %v358, %v359
        %vm361 = vcmp.lt.s32.totalorder %v342, 1
        %vm362 = vcmp.lt.s32.totalorder %v342, 2
        %vm363 = vcmp.lt.s32.totalorder %v342, 3
        %vm364 = vcmp.lt.s32.totalorder %v342, 4
        %v365 = vsel %vm361, %v345, %v348
        %v366 = vsel %vm364, %v354, 2102212464
        %v367 = vsel %vm363, %v351, %v366
        %v368 = vsel %vm362, %v365, %v367
        %v369 = vsel %vm361, %v348, %v351
        %v370 = vsel %vm364, %v357, 920167782
        %v371 = vsel %vm363, %v354, %v370
        %v372 = vsel %vm362, %v369, %v371
        %v373 = vsel %vm361, %v351, %v354
        %v374 = vsel %vm364, %v360, 1326507024
        %v375 = vsel %vm363, %v357, %v374
        %v376 = vsel %vm362, %v373, %v375
        %v377 = vshll.u32 %v337, 8
        %v378 = vmul.u32.u64.compose %v377, %v376
        %v379 = vextract.low.u32 %v378
        %v380 = vextract.high.u32 %v378
        %v381 = vmul.u32.u64.compose %v377, %v372
        %v382 = vextract.low.u32 %v381
        %v383 = vextract.high.u32 %v381
        %v384 = vmul.u32 %v377, %v368
        %v385 = vadd.s32 %v380, %v382
        %vm386 = vc.u32 %v380, %v382
        %v387 = vadd.s32 %v383, 1
        %v388 = vsel %vm386, %v387, %v383
        %v389 = vadd.s32 %v384, %v388
        %v390 = vadd.s32 %v389, 536870912
        %v391 = vshrl.u32 %v390, 30
        %v392 = vshll.u32 %v391, 30
        %v393 = vsub.s32 %v389, %v392
        %vm394 = vcmp.lt.s32.totalorder %v393, 0
        %v395 = vsub.s32 0, %v393
        %v396 = vsel %vm394, %v395, %v393
        %v397 = vclz %v396
        %v398 = vsub.s32 %v397, 2
        %vm399 = vcmp.gt.s32.totalorder 0, %v398
        %v400 = vsel %vm399, 0, %v398
        %v401 = vsub.s32 32, %v400
        %v402 = vshll.u32 %v393, %v400
        %v403 = vshrl.u32 %v385, %v401
        %v404 = vor.u32 %v402, %v403
        %v405 = vsub.s32 4294967266, %v400
        %v406 = vadd.s32 %v405, 127
        %v407 = vshll.u32 %v406, 23
        %v408 = vor.u32 4788187, %v407
        %v409 = vand.u32 2147483647, %v408
        %v411 = vcvt.s32.f32 %v404
        %v412 = vmul.f32 %v411, %v409
        %v413 = vxor.u32 %v412, 2147483648
        %v414 = vsel %vm331, %v413, %v412
        %v415 = vsub.s32 4, %v391
        %v416 = vsel %vm331, %v415, %v391
        %v417 = vsel %vm330, %v224, %v414
        %v418 = vsel %vm330, 0, %v416
        %v419 = vcosq.f32.pop %v417
        %v420 = vsinq.f32.pop %v417
        %vm421 = vweird.f32 %v224
        %v422 = vadd.s32 %v418, 3
        %v423 = vand.u32 %v422, 3
        %vm424 = vcmp.lt.s32.totalorder %v423, 2
        %vm425 = vcmp.eq.s32.totalorder %v423, 0
        %v426 = vxor.u32 %v420, 2147483648
        %v427 = vsel %vm425, %v419, %v426
        %vm428 = vcmp.eq.s32.totalorder %v423, 2
        %v429 = vxor.u32 %v419, 2147483648
        %v430 = vsel %vm428, %v429, %v420
        %v431 = vsel %vm424, %v427, %v430
        %v432 = vsel %vm421, nan, %v431
        %433 = vst [vmem:[%s137] sm:$0xff] %v328
        %434 = vst [vmem:[%s137 + $0x8] sm:$0xff] %v432
        %s435 = sand.u32 %s71, 1
        %s436 = scalar_lea.sflag [#allocation3], %s435
        %s437 = sand.u32 %s71, 1
        %s438 = smul.addr %s437, 16
        %s439 = scalar_lea.vmem [#allocation2], %s438
        // Predicated region
        $region29: #{tpu_custom_call.1} parent=27 // pred_check
          %p440 = pneg %p81
        $region30: #{tpu_custom_call.1} parent=27 // pred_check_branch
          %442 = sbr.rel (%p440) target = $region32
        $region31: #{tpu_custom_call.1} parent=27 // pred_region
          %s443 = smul.u32 2, %s16
          %s445 = ssub.s32 256, 256
          %446 = vsyncadd %s436, %s445
          %s447 = smul.addr %s443, 128
          %s448 = scalar_lea.hbm %s2, %s447
          %s449 = sshll.u32 %s439, 4
          %s450 = int_to_ptr.vmem [resolvable:$true] %s449
          %455 = dma.vmem_to_hbm [thread:$0]  %s450, 256, %s448, %s436, 128, 128, 8
        $region32: #{tpu_custom_call.1} parent=27 // pred_fallthru
          _
      $region28: #{tpu_custom_call.1} parent=5 // pred_fallthru
        _
      %p456 = scmp.le.s32.totalorder 2, %s11
      // Predicated region
      $region33: #{tpu_custom_call.1} parent=5 // pred_check
        %p457 = pneg %p456
      $region34: #{tpu_custom_call.1} parent=5 // pred_check_branch
        %459 = sbr.rel (%p457) target = $region36
      $region35: #{tpu_custom_call.1} parent=5 // pred_region
        %s460 = ssub.s32 %s11, 2
        // Predicated region
        $region37: #{tpu_custom_call.1} parent=35 // pred_check
          %p461 = pneg %p87
        $region38: #{tpu_custom_call.1} parent=35 // pred_check_branch
          %463 = sbr.rel (%p461) target = $region40
        $region39: #{tpu_custom_call.1} parent=35 // pred_region
          %s464 = sand.u32 %s72, 1
          %s465 = scalar_lea.sflag [#allocation3], %s464
          %s466 = sand.u32 %s72, 1
          %s467 = smul.addr %s466, 16
          %s468 = scalar_lea.vmem [#allocation2], %s467
          %469 = dma.done %s465, 256
        $region40: #{tpu_custom_call.1} parent=35 // pred_fallthru
          _
      $region36: #{tpu_custom_call.1} parent=5 // pred_fallthru
        _
    $region6: #{tpu_custom_call.1} parent=1 // loop_footer
      %s15 = sadd.s32 1, %s11
    $region7: #{tpu_custom_call.1} parent=1 // loop_footer_branch
      %10 = sbr.rel target = $region3
    $region8: #{tpu_custom_call.1} parent=1 // loop_exit
      _
    %470 = vsyncpa [#allocation3], 1
    %s471 = scalar_lea.sflag [#allocation3], 1
    %472 = vsyncpa %s471, 1

</llo_original>
